<compile_context>
chip_gen: v7x
topology: tpu7x:2x2x1
jax: 0.10.0
libtpu: 0.0.40
codegen_flags: <defaults>
</compile_context>

<pallas_src>
import jax
import jax.numpy as jnp
from jax.experimental import pallas as pl
from jax.experimental.pallas import tpu as pltpu


def _fused_permute_relu_kernel(x_ref, y_ref, z_ref, ox_ref, oy_ref, oz_ref):
    # ReLU on the VPU; the tiny 2-D transposes use the XLU slot (free here).
    ox_ref[...] = jnp.maximum(x_ref[...], 0.0).T   # (A0,A1)     -> (A1,A0)
    oy_ref[...] = jnp.maximum(y_ref[...], 0.0).T   # (B0,B1*B2)  -> (B1*B2,B0)
    oz_ref[...] = jnp.maximum(z_ref[...], 0.0)     # identity permutation


def _vmem_spec():
    return pl.BlockSpec(memory_space=pltpu.MemorySpace.VMEM)


def _fused_forward(x, y, z):
    A0, A1 = x.shape
    B0, B1, B2 = y.shape

    # Contiguous row-major reshapes: layout plumbing only (no data movement).
    y_slab = y.reshape(B0, B1 * B2)            # (4, 128) lane-dense slab
    zn = z.size
    if zn % 128 == 0:
        z_slab = z.reshape(zn // 128, 128)     # (8, 128): exactly 2 f32 vregs
    else:
        # TODO(synk): pad to a 128-lane multiple if a non-divisible z is ever used.
        z_slab = z.reshape(-1, z.shape[-1])

    total = x.size + y.size + z.size
    itemsize = jnp.dtype(x.dtype).itemsize

    ox, oy_slab, oz_slab = pl.pallas_call(
        _fused_permute_relu_kernel,
        out_shape=(
            jax.ShapeDtypeStruct((A1, A0), x.dtype),
            jax.ShapeDtypeStruct((B1 * B2, B0), y.dtype),
            jax.ShapeDtypeStruct(z_slab.shape, z.dtype),
        ),
        in_specs=[_vmem_spec(), _vmem_spec(), _vmem_spec()],
        out_specs=(_vmem_spec(), _vmem_spec(), _vmem_spec()),
        # z's net permutation is the identity: relu it in place.
        input_output_aliases={2: 2},
        # Tiny op: advertise the real (negligible) cost to XLA's scheduler.
        cost_estimate=pl.CostEstimate(
            flops=total, transcendentals=0, bytes_accessed=2 * total * itemsize
        ),
    )(x, y_slab, z_slab)

    x_out = ox                                  # already the final (A1, A0)
    y_out = oy_slab.reshape(B1, B2, B0)         # free reshape -> permute(1,2,0)
    z_out = oz_slab.reshape(z.shape)            # free reshape -> identity
    return x_out, y_out, z_out


# Donate z so the in-kernel {2: 2} alias is a true in-place relu.
model_forward = jax.jit(_fused_forward, donate_argnums=(2,))


if __name__ == "__main__":
    key = jax.random.PRNGKey(0)
    kx, ky, kz = jax.random.split(key, 3)

    x = jax.random.normal(kx, (8, 16), dtype=jnp.float32)
    y = jax.random.normal(ky, (4, 8, 16), dtype=jnp.float32)
    z = jax.random.normal(kz, (2, 4, 8, 16), dtype=jnp.float32)

    # Reference (pure JAX, mirrors the PyTorch forward).  Computed BEFORE the
    # kernel call because z is donated to the jitted forward.
    ref_x = jnp.maximum(jnp.transpose(x, (1, 0)), 0.0)
    ref_y = jnp.maximum(jnp.transpose(y, (1, 2, 0)), 0.0)
    ref_z = jnp.maximum(z, 0.0)
    jax.block_until_ready((ref_x, ref_y, ref_z))

    out_x, out_y, out_z = model_forward(x, y, z)
    jax.block_until_ready((out_x, out_y, out_z))

    assert out_x.shape == ref_x.shape and jnp.allclose(out_x, ref_x)
    assert out_y.shape == ref_y.shape and jnp.allclose(out_y, ref_y)
    assert out_z.shape == ref_z.shape and jnp.allclose(out_z, ref_z)

    print("KERNEL_OK")
</pallas_src>

<mosaic_0001>
module attributes {stable_mosaic.version = 11 : i64} {
  func.func @_fused_permute_relu_kernel(%arg0: memref<8x16xf32, #tpu.memory_space<vmem>>, %arg1: memref<4x128xf32, #tpu.memory_space<vmem>>, %arg2: memref<8x128xf32, #tpu.memory_space<vmem>>, %arg3: memref<16x8xf32, #tpu.memory_space<vmem>>, %arg4: memref<128x4xf32, #tpu.memory_space<vmem>>, %arg5: memref<8x128xf32, #tpu.memory_space<vmem>>) attributes {dimension_semantics = [], scalar_prefetch = 0 : i64, scratch_operands = 0 : i64, tpu.core_type = #tpu.core_type<tc>} {
    %c0 = arith.constant 0 : index
    %c0_0 = arith.constant 0 : index
    %0 = vector.load %arg0[%c0, %c0_0] : memref<8x16xf32, #tpu.memory_space<vmem>>, vector<8x16xf32>
    %cst = arith.constant 0.000000e+00 : f32
    %1 = vector.broadcast %cst : f32 to vector<8x16xf32>
    %2 = arith.maximumf %0, %1 : vector<8x16xf32>
    %3 = tpu.transpose %2, [1, 0] : vector<8x16xf32> -> vector<16x8xf32>
    %c0_1 = arith.constant 0 : index
    %c0_2 = arith.constant 0 : index
    %4 = vector.load %arg3[%c0_1, %c0_2] : memref<16x8xf32, #tpu.memory_space<vmem>>, vector<16x8xf32>
    tpu.vector_store %arg3[%c0_1, %c0_2], %3 {strides = array<i32>} : memref<16x8xf32, #tpu.memory_space<vmem>>, vector<16x8xf32>,
    %c0_3 = arith.constant 0 : index
    %c0_4 = arith.constant 0 : index
    %5 = vector.load %arg1[%c0_3, %c0_4] : memref<4x128xf32, #tpu.memory_space<vmem>>, vector<4x128xf32>
    %cst_5 = arith.constant 0.000000e+00 : f32
    %6 = vector.broadcast %cst_5 : f32 to vector<4x128xf32>
    %7 = arith.maximumf %5, %6 : vector<4x128xf32>
    %8 = tpu.transpose %7, [1, 0] : vector<4x128xf32> -> vector<128x4xf32>
    %c0_6 = arith.constant 0 : index
    %c0_7 = arith.constant 0 : index
    %9 = vector.load %arg4[%c0_6, %c0_7] : memref<128x4xf32, #tpu.memory_space<vmem>>, vector<128x4xf32>
    tpu.vector_store %arg4[%c0_6, %c0_7], %8 {strides = array<i32>} : memref<128x4xf32, #tpu.memory_space<vmem>>, vector<128x4xf32>,
    %c0_8 = arith.constant 0 : index
    %c0_9 = arith.constant 0 : index
    %10 = vector.load %arg2[%c0_8, %c0_9] : memref<8x128xf32, #tpu.memory_space<vmem>>, vector<8x128xf32>
    %cst_10 = arith.constant 0.000000e+00 : f32
    %11 = vector.broadcast %cst_10 : f32 to vector<8x128xf32>
    %12 = arith.maximumf %10, %11 : vector<8x128xf32>
    %c0_11 = arith.constant 0 : index
    %c0_12 = arith.constant 0 : index
    %13 = vector.load %arg5[%c0_11, %c0_12] : memref<8x128xf32, #tpu.memory_space<vmem>>, vector<8x128xf32>
    tpu.vector_store %arg5[%c0_11, %c0_12], %12 {strides = array<i32>} : memref<8x128xf32, #tpu.memory_space<vmem>>, vector<8x128xf32>,
    return
  }
}

</mosaic_0001>

<llo_original>
// kernel: _fused_forward.1
$region0: #{_fused_forward.1}
  #allocation0 [shape = 'u32[]', space=smem, size = 0x4, offset = 0x4, fixed_abs, tag = 'smem constant byte address 0x4 - core index']
  #allocation1 [shape = 'u32[144,128]{1,0:T(1,128)}', space=vmem, size = 0x12000, scoped, tag = 'internal scratch']
  %s0 = inlined_call_operand.vmem [shape: f32[8,16], index: 0, kind: input, shape index: {}]
  %s1 = inlined_call_operand.vmem [shape: f32[4,128], index: 1, kind: input, shape index: {}]
  %s2 = inlined_call_operand.vmem [shape: f32[8,128], index: 2, kind: input, shape index: {}, may-alias: {2,5}]
  %s3 = inlined_call_operand.vmem [shape: f32[16,8], index: 3, kind: output, shape index: {0}]
  %s4 = inlined_call_operand.vmem [shape: f32[128,4], index: 4, kind: output, shape index: {1}]
  %s5 = inlined_call_operand.vmem [shape: f32[8,128], index: 5, kind: output, shape index: {2}, may-alias: {2,5}]
  %6 = xla_tuple %s3, %s4, %s5
  %s7 = sld [smem:[#allocation0]]
  $region38: #{_fused_forward.1} parent=0
    _
  %s9 = ssub.s32 1, %s7
  %s10 = scalar_select 0, %s9, %s7
  // Predicated region
  $region2: #{_fused_forward.1} parent=0 // pred_check
    _
  $region3: #{_fused_forward.1} parent=0 // pred_check_branch
    %12 = sbr.rel (0) target = $region5
  $region4: #{_fused_forward.1} parent=0 // pred_region
    _
  $region5: #{_fused_forward.1} parent=0 // pred_fallthru
    _
  // Predicated region
  $region6: #{_fused_forward.1} parent=0 // pred_check
    _
  $region7: #{_fused_forward.1} parent=0 // pred_check_branch
    %14 = sbr.rel (0) target = $region9
  $region8: #{_fused_forward.1} parent=0 // pred_region
    _
  $region9: #{_fused_forward.1} parent=0 // pred_fallthru
    _
  // Predicated region
  $region10: #{_fused_forward.1} parent=0 // pred_check
    _
  $region11: #{_fused_forward.1} parent=0 // pred_check_branch
    %16 = sbr.rel (0) target = $region13
  $region12: #{_fused_forward.1} parent=0 // pred_region
    _
  $region13: #{_fused_forward.1} parent=0 // pred_fallthru
    _
  %v17 = vld [vmem:[%s0] sm:$0xff]
  %v18 = vmax.f32 %v17, 0.0
  %19 = vxpose.xlu0.b32.start [1/16] %v18, 128
  %20 = vxpose.xlu0.b32.cont [2/16] 0.0, 128
  %21 = vxpose.xlu0.b32.cont [3/16] 0.0, 128
  %22 = vxpose.xlu0.b32.cont [4/16] 0.0, 128
  %23 = vxpose.xlu0.b32.cont [5/16] 0.0, 128
  %24 = vxpose.xlu0.b32.cont [6/16] 0.0, 128
  %25 = vxpose.xlu0.b32.cont [7/16] 0.0, 128
  %26 = vxpose.xlu0.b32.cont [8/16] 0.0, 128
  %27 = vxpose.xlu0.b32.cont [9/16] 0.0, 128
  %28 = vxpose.xlu0.b32.cont [10/16] 0.0, 128
  %29 = vxpose.xlu0.b32.cont [11/16] 0.0, 128
  %30 = vxpose.xlu0.b32.cont [12/16] 0.0, 128
  %31 = vxpose.xlu0.b32.cont [13/16] 0.0, 128
  %32 = vxpose.xlu0.b32.cont [14/16] 0.0, 128
  %33 = vxpose.xlu0.b32.cont [15/16] 0.0, 128
  %34 = vxpose.xlu0.b32.end [16/16] 0.0, 128
  %v35 = vpop.trf.xlu0
  %v36 = vpop.trf.xlu0
  %v37 = vpop.trf.xlu0
  %v38 = vpop.trf.xlu0
  %v39 = vpop.trf.xlu0
  %v40 = vpop.trf.xlu0
  %v41 = vpop.trf.xlu0
  %v42 = vpop.trf.xlu0
  %v43 = vpop.trf.xlu0
  %v44 = vpop.trf.xlu0
  %v45 = vpop.trf.xlu0
  %v46 = vpop.trf.xlu0
  %v47 = vpop.trf.xlu0
  %v48 = vpop.trf.xlu0
  %v49 = vpop.trf.xlu0
  %v50 = vpop.trf.xlu0
  %vm51 = vcmask 64512
  %52 = vst.msk [vmem:[%s3] sm:$0xff] %vm51, %v35
  %53 = vst.msk [vmem:[%s3 + $0x8] sm:$0xff] %vm51, %v36
  %v54 = vld [vmem:[%s1] sm:$0xf]
  %v55 = vmax.f32 %v54, 0.0
  %56 = vxpose.xlu0.b32.start [1/16] %v55, 128
  %57 = vxpose.xlu0.b32.cont [2/16] 0.0, 128
  %58 = vxpose.xlu0.b32.cont [3/16] 0.0, 128
  %59 = vxpose.xlu0.b32.cont [4/16] 0.0, 128
  %60 = vxpose.xlu0.b32.cont [5/16] 0.0, 128
  %61 = vxpose.xlu0.b32.cont [6/16] 0.0, 128
  %62 = vxpose.xlu0.b32.cont [7/16] 0.0, 128
  %63 = vxpose.xlu0.b32.cont [8/16] 0.0, 128
  %64 = vxpose.xlu0.b32.cont [9/16] 0.0, 128
  %65 = vxpose.xlu0.b32.cont [10/16] 0.0, 128
  %66 = vxpose.xlu0.b32.cont [11/16] 0.0, 128
  %67 = vxpose.xlu0.b32.cont [12/16] 0.0, 128
  %68 = vxpose.xlu0.b32.cont [13/16] 0.0, 128
  %69 = vxpose.xlu0.b32.cont [14/16] 0.0, 128
  %70 = vxpose.xlu0.b32.cont [15/16] 0.0, 128
  %71 = vxpose.xlu0.b32.end [16/16] 0.0, 128
  %v72 = vpop.trf.xlu0
  %v73 = vpop.trf.xlu0
  %v74 = vpop.trf.xlu0
  %v75 = vpop.trf.xlu0
  %v76 = vpop.trf.xlu0
  %v77 = vpop.trf.xlu0
  %v78 = vpop.trf.xlu0
  %v79 = vpop.trf.xlu0
  %v80 = vpop.trf.xlu0
  %v81 = vpop.trf.xlu0
  %v82 = vpop.trf.xlu0
  %v83 = vpop.trf.xlu0
  %v84 = vpop.trf.xlu0
  %v85 = vpop.trf.xlu0
  %v86 = vpop.trf.xlu0
  %v87 = vpop.trf.xlu0
  %vm88 = vcmask 31744
  %89 = vst.msk [vmem:[%s4] sm:$0xff] %vm88, %v72
  %90 = vst.msk [vmem:[%s4 + $0x8] sm:$0xff] %vm88, %v73
  %91 = vst.msk [vmem:[%s4 + $0x10] sm:$0xff] %vm88, %v74
  %92 = vst.msk [vmem:[%s4 + $0x18] sm:$0xff] %vm88, %v75
  %93 = vst.msk [vmem:[%s4 + $0x20] sm:$0xff] %vm88, %v76
  %94 = vst.msk [vmem:[%s4 + $0x28] sm:$0xff] %vm88, %v77
  %95 = vst.msk [vmem:[%s4 + $0x30] sm:$0xff] %vm88, %v78
  %96 = vst.msk [vmem:[%s4 + $0x38] sm:$0xff] %vm88, %v79
  %97 = vst.msk [vmem:[%s4 + $0x40] sm:$0xff] %vm88, %v80
  %98 = vst.msk [vmem:[%s4 + $0x48] sm:$0xff] %vm88, %v81
  %99 = vst.msk [vmem:[%s4 + $0x50] sm:$0xff] %vm88, %v82
  %100 = vst.msk [vmem:[%s4 + $0x58] sm:$0xff] %vm88, %v83
  %101 = vst.msk [vmem:[%s4 + $0x60] sm:$0xff] %vm88, %v84
  %102 = vst.msk [vmem:[%s4 + $0x68] sm:$0xff] %vm88, %v85
  %103 = vst.msk [vmem:[%s4 + $0x70] sm:$0xff] %vm88, %v86
  %104 = vst.msk [vmem:[%s4 + $0x78] sm:$0xff] %vm88, %v87
  %v105 = vld [vmem:[%s2] sm:$0xff]
  %v106 = vmax.f32 %v105, 0.0
  %107 = vst [vmem:[%s5] sm:$0xff] %v106
  // Predicated region
  $region14: #{_fused_forward.1} parent=0 // pred_check
    _
  $region15: #{_fused_forward.1} parent=0 // pred_check_branch
    %109 = sbr.rel (0) target = $region17
  $region16: #{_fused_forward.1} parent=0 // pred_region
    _
  $region17: #{_fused_forward.1} parent=0 // pred_fallthru
    _
  // Predicated region
  $region18: #{_fused_forward.1} parent=0 // pred_check
    _
  $region19: #{_fused_forward.1} parent=0 // pred_check_branch
    %111 = sbr.rel (0) target = $region21
  $region20: #{_fused_forward.1} parent=0 // pred_region
    _
  $region21: #{_fused_forward.1} parent=0 // pred_fallthru
    _
  // Predicated region
  $region22: #{_fused_forward.1} parent=0 // pred_check
    _
  $region23: #{_fused_forward.1} parent=0 // pred_check_branch
    %113 = sbr.rel (0) target = $region25
  $region24: #{_fused_forward.1} parent=0 // pred_region
    _
  $region25: #{_fused_forward.1} parent=0 // pred_fallthru
    _
  // Predicated region
  $region26: #{_fused_forward.1} parent=0 // pred_check
    _
  $region27: #{_fused_forward.1} parent=0 // pred_check_branch
    %115 = sbr.rel (0) target = $region29
  $region28: #{_fused_forward.1} parent=0 // pred_region
    _
  $region29: #{_fused_forward.1} parent=0 // pred_fallthru
    _
  // Predicated region
  $region30: #{_fused_forward.1} parent=0 // pred_check
    _
  $region31: #{_fused_forward.1} parent=0 // pred_check_branch
    %117 = sbr.rel (0) target = $region33
  $region32: #{_fused_forward.1} parent=0 // pred_region
    _
  $region33: #{_fused_forward.1} parent=0 // pred_fallthru
    _
  // Predicated region
  $region34: #{_fused_forward.1} parent=0 // pred_check
    _
  $region35: #{_fused_forward.1} parent=0 // pred_check_branch
    %119 = sbr.rel (0) target = $region37
  $region36: #{_fused_forward.1} parent=0 // pred_region
    _
  $region37: #{_fused_forward.1} parent=0 // pred_fallthru
    _

</llo_original>
